<compile_context>
chip_gen: v6e
topology: v6e:2x2x1
jax: 0.10.0
libtpu: 0.0.40
codegen_flags: <defaults>
</compile_context>

<pallas_src>
import math
import functools

import jax
import jax.numpy as jnp
from jax.experimental import pallas as pl
from jax.experimental.pallas import tpu as pltpu

LANES = 128
MAX_BLOCK_ROWS = 1024   # 1024 x 128 f32 = 512 KiB per input per grid step.
                        # 7 inputs x 2 (double buffer) = 7 MiB of VMEM.


def _round_up(x: int, m: int) -> int:
    return ((x + m - 1) // m) * m


def _loss_kernel(u_ref, v_ref, su_ref, ku_ref, kv_ref, tu_ref, tv_ref,
                 out_ref, *, sigma_lower_bound, log2pi, tail_valid, block_rows):
    u = u_ref[...].astype(jnp.float32)
    v = v_ref[...].astype(jnp.float32)
    sigma_u = su_ref[...].astype(jnp.float32)
    kappa_u = ku_ref[...].astype(jnp.float32)
    kappa_v = kv_ref[...].astype(jnp.float32)
    target_u = tu_ref[...].astype(jnp.float32)
    target_v = tv_ref[...].astype(jnp.float32)

    # sigma2 = softplus(sigma_u) + lower_bound  (EUP exp/log, VPU elementwise)
    sigma2 = jax.nn.softplus(sigma_u) + jnp.float32(sigma_lower_bound)
    r_sqnorm2 = kappa_u * kappa_u + kappa_v * kappa_v
    delta_u = u - target_u
    delta_v = v - target_v
    delta_sqnorm = delta_u * delta_u + delta_v * delta_v
    delta_r = delta_u * kappa_u + delta_v * kappa_v
    denom2 = sigma2 * (sigma2 + r_sqnorm2)

    loss = 0.5 * (jnp.float32(log2pi) + jnp.log(denom2)
                  + delta_sqnorm / sigma2
                  - (delta_r * delta_r) / denom2)

    def partial_sum(x):
        # (block_rows, 128) -> (8, 128): pure vreg adds, no cross-lane (XLU) work.
        return jnp.sum(x.reshape(-1, 8, LANES), axis=0)

    full_tile = tail_valid == block_rows * LANES   # static Python bool
    if full_tile:
        # No padding anywhere — no masking on any block.
        out_ref[...] = partial_sum(loss)
    else:
        i = pl.program_id(0)
        last = pl.num_programs(0) - 1

        @pl.when(i != last)
        def _():
            out_ref[...] = partial_sum(loss)

        @pl.when(i == last)
        def _():
            # Block-local indices only (no int32 overflow for any input size).
            rows = jax.lax.broadcasted_iota(jnp.int32, loss.shape, 0)
            cols = jax.lax.broadcasted_iota(jnp.int32, loss.shape, 1)
            idx = rows * LANES + cols
            masked = jnp.where(idx < tail_valid, loss, jnp.float32(0.0))
            out_ref[...] = partial_sum(masked)


@functools.partial(jax.jit, static_argnames=("sigma_lower_bound",))
def indep_anisotropic_gaussian_uv_loss(u, v, sigma_u, kappa_u_est, kappa_v_est,
                                       target_u, target_v,
                                       sigma_lower_bound: float):
    """Scalar NLL sum, matching IndepAnisotropicGaussianUVLoss.forward."""
    log2pi = math.log(2.0 * math.pi)
    n = int(u.size)
    if n == 0:
        return jnp.float32(0.0)

    rows = pl.cdiv(n, LANES)
    block_rows = min(MAX_BLOCK_ROWS, _round_up(rows, 16))
    num_blocks = pl.cdiv(rows, block_rows)
    rows_pad = num_blocks * block_rows
    n_pad = rows_pad * LANES
    # Number of valid elements inside the last grid block.
    tail_valid = n - (num_blocks - 1) * block_rows * LANES

    def prep(x):
        x = jnp.ravel(x)                 # keep source dtype (bf16 stays bf16 on DMA)
        if n_pad != n:
            x = jnp.pad(x, (0, n_pad - n))
        return x.reshape(rows_pad, LANES)

    inputs = [prep(t) for t in (u, v, sigma_u, kappa_u_est, kappa_v_est,
                                target_u, target_v)]

    kernel = functools.partial(_loss_kernel,
                               sigma_lower_bound=float(sigma_lower_bound),
                               log2pi=log2pi,
                               tail_valid=tail_valid,
                               block_rows=block_rows)

    in_spec = pl.BlockSpec((block_rows, LANES), lambda i: (i, 0))
    bytes_in = sum(x.size * x.dtype.itemsize for x in inputs)
    cost = pl.CostEstimate(flops=25 * n_pad,
                           transcendentals=3 * n_pad,
                           bytes_accessed=bytes_in + num_blocks * 8 * LANES * 4)

    partials = pl.pallas_call(
        kernel,
        out_shape=jax.ShapeDtypeStruct((num_blocks * 8, LANES), jnp.float32),
        grid_spec=pltpu.PrefetchScalarGridSpec(
            num_scalar_prefetch=0,
            grid=(num_blocks,),
            in_specs=[in_spec] * 7,
            out_specs=pl.BlockSpec((8, LANES), lambda i: (i, 0)),
        ),
        compiler_params=pltpu.CompilerParams(
            dimension_semantics=("parallel",)),     # independent blocks -> both TCs on v7x
        cost_estimate=cost,
    )(*inputs)

    return jnp.sum(partials)


def _reference(u, v, sigma_u, kappa_u_est, kappa_v_est, target_u, target_v,
               sigma_lower_bound):
    log2pi = math.log(2.0 * math.pi)
    sigma2 = jax.nn.softplus(sigma_u) + sigma_lower_bound
    r_sqnorm2 = kappa_u_est ** 2 + kappa_v_est ** 2
    delta_u = u - target_u
    delta_v = v - target_v
    delta_sqnorm = delta_u ** 2 + delta_v ** 2
    delta_r = delta_u * kappa_u_est + delta_v * kappa_v_est
    delta_r_sqnorm = delta_r ** 2
    denom2 = sigma2 * (sigma2 + r_sqnorm2)
    loss = 0.5 * (log2pi + jnp.log(denom2) + delta_sqnorm / sigma2
                  - delta_r_sqnorm / denom2)
    return jnp.sum(loss)


def _run_case(shape, sigma_lower_bound, seed=0):
    keys = jax.random.split(jax.random.PRNGKey(seed), 7)
    args = [jax.random.normal(k, shape, jnp.float32) for k in keys]
    out = indep_anisotropic_gaussian_uv_loss(*args, sigma_lower_bound=sigma_lower_bound)
    out = jax.block_until_ready(out)
    ref = _reference(*args, sigma_lower_bound)
    assert jnp.allclose(out, ref, rtol=1e-4, atol=1e-2), (shape, out, ref)


if __name__ == "__main__":
    # Module has no learned parameters; only hyperparameter sigma_lower_bound.
    sigma_lower_bound = 0.01

    # Primary small NCHW-like case (exact tile multiple, no padding path).
    _run_case((2, 4, 16, 16), sigma_lower_bound)

    # Ragged case (exercises the masked final-block path).
    _run_case((3, 5, 7, 11), sigma_lower_bound)

    # Multi-block case (exercises the parallel grid + per-block partial sums).
    _run_case((1, 1, 384, 384), sigma_lower_bound)

    print("KERNEL_OK")
</pallas_src>

<mosaic_0001>
module attributes {stable_mosaic.version = 11 : i64} {
  func.func @_loss_kernel(%arg0: i32, %arg1: memref<16x128xf32, #tpu.memory_space<vmem>>, %arg2: memref<16x128xf32, #tpu.memory_space<vmem>>, %arg3: memref<16x128xf32, #tpu.memory_space<vmem>>, %arg4: memref<16x128xf32, #tpu.memory_space<vmem>>, %arg5: memref<16x128xf32, #tpu.memory_space<vmem>>, %arg6: memref<16x128xf32, #tpu.memory_space<vmem>>, %arg7: memref<16x128xf32, #tpu.memory_space<vmem>>, %arg8: memref<8x128xf32, #tpu.memory_space<vmem>>) attributes {dimension_semantics = [#tpu.dimension_semantics<parallel>], iteration_bounds = array<i64: 1>, scalar_prefetch = 0 : i64, scratch_operands = 0 : i64, tpu.core_type = #tpu.core_type<tc>, window_params = [{transform_indices = @transform_0, window_bounds = array<i64: 16, 128>}, {transform_indices = @transform_1, window_bounds = array<i64: 16, 128>}, {transform_indices = @transform_2, window_bounds = array<i64: 16, 128>}, {transform_indices = @transform_3, window_bounds = array<i64: 16, 128>}, {transform_indices = @transform_4, window_bounds = array<i64: 16, 128>}, {transform_indices = @transform_5, window_bounds = array<i64: 16, 128>}, {transform_indices = @transform_6, window_bounds = array<i64: 16, 128>}, {transform_indices = @transform_7, window_bounds = array<i64: 8, 128>}]} {
    %c0 = arith.constant 0 : index
    %c0_0 = arith.constant 0 : index
    %0 = vector.load %arg1[%c0, %c0_0] : memref<16x128xf32, #tpu.memory_space<vmem>>, vector<16x128xf32>
    %c0_1 = arith.constant 0 : index
    %c0_2 = arith.constant 0 : index
    %1 = vector.load %arg2[%c0_1, %c0_2] : memref<16x128xf32, #tpu.memory_space<vmem>>, vector<16x128xf32>
    %c0_3 = arith.constant 0 : index
    %c0_4 = arith.constant 0 : index
    %2 = vector.load %arg3[%c0_3, %c0_4] : memref<16x128xf32, #tpu.memory_space<vmem>>, vector<16x128xf32>
    %c0_5 = arith.constant 0 : index
    %c0_6 = arith.constant 0 : index
    %3 = vector.load %arg4[%c0_5, %c0_6] : memref<16x128xf32, #tpu.memory_space<vmem>>, vector<16x128xf32>
    %c0_7 = arith.constant 0 : index
    %c0_8 = arith.constant 0 : index
    %4 = vector.load %arg5[%c0_7, %c0_8] : memref<16x128xf32, #tpu.memory_space<vmem>>, vector<16x128xf32>
    %c0_9 = arith.constant 0 : index
    %c0_10 = arith.constant 0 : index
    %5 = vector.load %arg6[%c0_9, %c0_10] : memref<16x128xf32, #tpu.memory_space<vmem>>, vector<16x128xf32>
    %c0_11 = arith.constant 0 : index
    %c0_12 = arith.constant 0 : index
    %6 = vector.load %arg7[%c0_11, %c0_12] : memref<16x128xf32, #tpu.memory_space<vmem>>, vector<16x128xf32>
    %cst = arith.constant 0.000000e+00 : f32
    %7 = vector.broadcast %cst : f32 to vector<16x128xf32>
    %8 = arith.maximumf %2, %7 : vector<16x128xf32>
    %9 = vector.broadcast %cst : f32 to vector<16x128xf32>
    %10 = arith.subf %2, %9 : vector<16x128xf32>
    %11 = arith.cmpf one, %10, %10 : vector<16x128xf32>
    %12 = vector.broadcast %cst : f32 to vector<16x128xf32>
    %13 = arith.addf %2, %12 : vector<16x128xf32>
    %14 = math.absf %10 : vector<16x128xf32>
    %cst_13 = arith.constant 0.000000e+00 : f32
    %15 = vector.broadcast %cst_13 : f32 to vector<16x128xf32>
    %16 = arith.subf %15, %14 : vector<16x128xf32>
    %17 = math.exp %16 : vector<16x128xf32>
    %18 = math.log1p %17 : vector<16x128xf32>
    %19 = arith.addf %8, %18 : vector<16x128xf32>
    %20 = arith.select %11, %13, %19 : vector<16x128xi1>, vector<16x128xf32>
    %cst_14 = arith.constant 0.00999999977 : f32
    %21 = vector.broadcast %cst_14 : f32 to vector<16x128xf32>
    %22 = arith.addf %20, %21 : vector<16x128xf32>
    %23 = arith.mulf %3, %3 : vector<16x128xf32>
    %24 = arith.mulf %4, %4 : vector<16x128xf32>
    %25 = arith.addf %23, %24 : vector<16x128xf32>
    %26 = arith.subf %0, %5 : vector<16x128xf32>
    %27 = arith.subf %1, %6 : vector<16x128xf32>
    %28 = arith.mulf %26, %26 : vector<16x128xf32>
    %29 = arith.mulf %27, %27 : vector<16x128xf32>
    %30 = arith.addf %28, %29 : vector<16x128xf32>
    %31 = arith.mulf %26, %3 : vector<16x128xf32>
    %32 = arith.mulf %27, %4 : vector<16x128xf32>
    %33 = arith.addf %31, %32 : vector<16x128xf32>
    %34 = arith.addf %22, %25 : vector<16x128xf32>
    %35 = arith.mulf %22, %34 : vector<16x128xf32>
    %36 = math.log %35 : vector<16x128xf32>
    %cst_15 = arith.constant 1.83787704 : f32
    %37 = vector.broadcast %cst_15 : f32 to vector<16x128xf32>
    %38 = arith.addf %37, %36 : vector<16x128xf32>
    %39 = arith.divf %30, %22 : vector<16x128xf32>
    %40 = arith.addf %38, %39 : vector<16x128xf32>
    %41 = arith.mulf %33, %33 : vector<16x128xf32>
    %42 = arith.divf %41, %35 : vector<16x128xf32>
    %43 = arith.subf %40, %42 : vector<16x128xf32>
    %cst_16 = arith.constant 5.000000e-01 : f32
    %44 = vector.broadcast %cst_16 : f32 to vector<16x128xf32>
    %45 = arith.mulf %44, %43 : vector<16x128xf32>
    %46 = vector.shape_cast %45 : vector<16x128xf32> to vector<2x8x128xf32>
    %cst_17 = arith.constant dense<0.000000e+00> : vector<8x128xf32>
    %47 = vector.multi_reduction <add>, %46, %cst_17 [0] : vector<2x8x128xf32> to vector<8x128xf32>
    %c0_18 = arith.constant 0 : index
    %c0_19 = arith.constant 0 : index
    %48 = vector.load %arg8[%c0_18, %c0_19] : memref<8x128xf32, #tpu.memory_space<vmem>>, vector<8x128xf32>
    tpu.vector_store %arg8[%c0_18, %c0_19], %47 {strides = array<i32>} : memref<8x128xf32, #tpu.memory_space<vmem>>, vector<8x128xf32>,
    return
  }
  func.func @transform_0(%arg0: i32) -> (i32, i32) {
    %c0_i32 = arith.constant 0 : i32
    %c0_i32_0 = arith.constant 0 : i32
    return %arg0, %c0_i32 : i32, i32
  }
  func.func @transform_1(%arg0: i32) -> (i32, i32) {
    %c0_i32 = arith.constant 0 : i32
    %c0_i32_0 = arith.constant 0 : i32
    return %arg0, %c0_i32 : i32, i32
  }
  func.func @transform_2(%arg0: i32) -> (i32, i32) {
    %c0_i32 = arith.constant 0 : i32
    %c0_i32_0 = arith.constant 0 : i32
    return %arg0, %c0_i32 : i32, i32
  }
  func.func @transform_3(%arg0: i32) -> (i32, i32) {
    %c0_i32 = arith.constant 0 : i32
    %c0_i32_0 = arith.constant 0 : i32
    return %arg0, %c0_i32 : i32, i32
  }
  func.func @transform_4(%arg0: i32) -> (i32, i32) {
    %c0_i32 = arith.constant 0 : i32
    %c0_i32_0 = arith.constant 0 : i32
    return %arg0, %c0_i32 : i32, i32
  }
  func.func @transform_5(%arg0: i32) -> (i32, i32) {
    %c0_i32 = arith.constant 0 : i32
    %c0_i32_0 = arith.constant 0 : i32
    return %arg0, %c0_i32 : i32, i32
  }
  func.func @transform_6(%arg0: i32) -> (i32, i32) {
    %c0_i32 = arith.constant 0 : i32
    %c0_i32_0 = arith.constant 0 : i32
    return %arg0, %c0_i32 : i32, i32
  }
  func.func @transform_7(%arg0: i32) -> (i32, i32) {
    %c0_i32 = arith.constant 0 : i32
    %c0_i32_0 = arith.constant 0 : i32
    return %arg0, %c0_i32 : i32, i32
  }
}

</mosaic_0001>

<llo_original>
// kernel: indep_anisotropic_gaussian_uv_loss.1
$region0: #{indep_anisotropic_gaussian_uv_loss.1}
  #allocation0 [shape = 'u32[]', space=smem, size = 0x4, offset = 0x4, fixed_abs, tag = 'smem constant byte address 0x4 - core index']
  #allocation1 [shape = 'u32[144,128]{1,0:T(1,128)}', space=vmem, size = 0x12000, scoped, tag = 'internal scratch']
  %s0 = inlined_call_operand.vmem [shape: f32[16,128], index: 0, kind: input, shape index: {}]
  %s1 = inlined_call_operand.vmem [shape: f32[16,128], index: 1, kind: input, shape index: {}]
  %s2 = inlined_call_operand.vmem [shape: f32[16,128], index: 2, kind: input, shape index: {}]
  %s3 = inlined_call_operand.vmem [shape: f32[16,128], index: 3, kind: input, shape index: {}]
  %s4 = inlined_call_operand.vmem [shape: f32[16,128], index: 4, kind: input, shape index: {}]
  %s5 = inlined_call_operand.vmem [shape: f32[16,128], index: 5, kind: input, shape index: {}]
  %s6 = inlined_call_operand.vmem [shape: f32[16,128], index: 6, kind: input, shape index: {}]
  %s7 = inlined_call_operand.vmem [shape: f32[8,128], index: 7, kind: output, shape index: {}]
  %s8 = sld [smem:[#allocation0]]
  $region38: #{indep_anisotropic_gaussian_uv_loss.1} parent=0
    _
  %s10 = ssub.s32 1, %s8
  %s11 = scalar_select 0, %s10, %s8
  // Predicated region
  $region2: #{indep_anisotropic_gaussian_uv_loss.1} parent=0 // pred_check
    _
  $region3: #{indep_anisotropic_gaussian_uv_loss.1} parent=0 // pred_check_branch
    %13 = sbr.rel (0) target = $region5
  $region4: #{indep_anisotropic_gaussian_uv_loss.1} parent=0 // pred_region
    _
  $region5: #{indep_anisotropic_gaussian_uv_loss.1} parent=0 // pred_fallthru
    _
  // Predicated region
  $region6: #{indep_anisotropic_gaussian_uv_loss.1} parent=0 // pred_check
    _
  $region7: #{indep_anisotropic_gaussian_uv_loss.1} parent=0 // pred_check_branch
    %15 = sbr.rel (0) target = $region9
  $region8: #{indep_anisotropic_gaussian_uv_loss.1} parent=0 // pred_region
    _
  $region9: #{indep_anisotropic_gaussian_uv_loss.1} parent=0 // pred_fallthru
    _
  // Predicated region
  $region10: #{indep_anisotropic_gaussian_uv_loss.1} parent=0 // pred_check
    _
  $region11: #{indep_anisotropic_gaussian_uv_loss.1} parent=0 // pred_check_branch
    %17 = sbr.rel (0) target = $region13
  $region12: #{indep_anisotropic_gaussian_uv_loss.1} parent=0 // pred_region
    _
  $region13: #{indep_anisotropic_gaussian_uv_loss.1} parent=0 // pred_fallthru
    _
  // Predicated region
  $region14: #{indep_anisotropic_gaussian_uv_loss.1} parent=0 // pred_check
    _
  $region15: #{indep_anisotropic_gaussian_uv_loss.1} parent=0 // pred_check_branch
    %19 = sbr.rel (0) target = $region17
  $region16: #{indep_anisotropic_gaussian_uv_loss.1} parent=0 // pred_region
    _
  $region17: #{indep_anisotropic_gaussian_uv_loss.1} parent=0 // pred_fallthru
    _
  // Predicated region
  $region18: #{indep_anisotropic_gaussian_uv_loss.1} parent=0 // pred_check
    _
  $region19: #{indep_anisotropic_gaussian_uv_loss.1} parent=0 // pred_check_branch
    %21 = sbr.rel (0) target = $region21
  $region20: #{indep_anisotropic_gaussian_uv_loss.1} parent=0 // pred_region
    _
  $region21: #{indep_anisotropic_gaussian_uv_loss.1} parent=0 // pred_fallthru
    _
  // Predicated region
  $region22: #{indep_anisotropic_gaussian_uv_loss.1} parent=0 // pred_check
    _
  $region23: #{indep_anisotropic_gaussian_uv_loss.1} parent=0 // pred_check_branch
    %23 = sbr.rel (0) target = $region25
  $region24: #{indep_anisotropic_gaussian_uv_loss.1} parent=0 // pred_region
    _
  $region25: #{indep_anisotropic_gaussian_uv_loss.1} parent=0 // pred_fallthru
    _
  // Predicated region
  $region26: #{indep_anisotropic_gaussian_uv_loss.1} parent=0 // pred_check
    _
  $region27: #{indep_anisotropic_gaussian_uv_loss.1} parent=0 // pred_check_branch
    %25 = sbr.rel (0) target = $region29
  $region28: #{indep_anisotropic_gaussian_uv_loss.1} parent=0 // pred_region
    _
  $region29: #{indep_anisotropic_gaussian_uv_loss.1} parent=0 // pred_fallthru
    _
  %v26 = vld [vmem:[%s0] sm:$0xff]
  %v27 = vld [vmem:[%s0 + $0x8] sm:$0xff]
  %v28 = vld [vmem:[%s1] sm:$0xff]
  %v29 = vld [vmem:[%s1 + $0x8] sm:$0xff]
  %v30 = vld [vmem:[%s2] sm:$0xff]
  %v31 = vld [vmem:[%s2 + $0x8] sm:$0xff]
  %v32 = vld [vmem:[%s3] sm:$0xff]
  %v33 = vld [vmem:[%s3 + $0x8] sm:$0xff]
  %v34 = vld [vmem:[%s4] sm:$0xff]
  %v35 = vld [vmem:[%s4 + $0x8] sm:$0xff]
  %v36 = vld [vmem:[%s5] sm:$0xff]
  %v37 = vld [vmem:[%s5 + $0x8] sm:$0xff]
  %v38 = vld [vmem:[%s6] sm:$0xff]
  %v39 = vld [vmem:[%s6 + $0x8] sm:$0xff]
  %v40 = vmax.f32 %v30, 0.0
  %v41 = vmax.f32 %v31, 0.0
  %vm42 = vcmp.ne.f32.partialorder %v30, %v30
  %vm43 = vcmp.ne.f32.partialorder %v31, %v31
  %v44 = vadd.f32 %v30, 0.0
  %v45 = vadd.f32 %v31, 0.0
  %v46 = vand.u32 2147483647, %v30
  %v47 = vand.u32 2147483647, %v31
  %v48 = vsub.f32 0.0, %v46
  %v49 = vsub.f32 0.0, %v47
  %v50 = vmul.f32 %v48, 1.442695
  %v51 = vpow.pop %v50
  %v52 = vmul.f32 %v49, 1.442695
  %v53 = vpow.pop %v52
  %v54 = vadd.f32 %v51, 1.0
  %v55 = vlog2.pop %v54
  %v56 = vmul.f32 %v55, 0.6931472
  %v57 = vmul.f32 -0.5, %v51
  %v58 = vadd.f32 %v57, 1.0
  %v59 = vmul.f32 %v58, %v51
  %v60 = vand.u32 2147483647, %v51
  %vm61 = vcmp.lt.f32.partialorder %v60, 0.0004427343
  %v62 = vsel %vm61, %v59, %v56
  %v63 = vadd.f32 %v53, 1.0
  %v64 = vlog2.pop %v63
  %v65 = vmul.f32 %v64, 0.6931472
  %v66 = vmul.f32 -0.5, %v53
  %v67 = vadd.f32 %v66, 1.0
  %v68 = vmul.f32 %v67, %v53
  %v69 = vand.u32 2147483647, %v53
  %vm70 = vcmp.lt.f32.partialorder %v69, 0.0004427343
  %v71 = vsel %vm70, %v68, %v65
  %v72 = vadd.f32 %v40, %v62
  %v73 = vadd.f32 %v41, %v71
  %v74 = vsel %vm42, %v44, %v72
  %v75 = vsel %vm43, %v45, %v73
  %v76 = vadd.f32 %v74, 0.01
  %v77 = vadd.f32 %v75, 0.01
  %v78 = vmul.f32 %v32, %v32
  %v79 = vmul.f32 %v33, %v33
  %v80 = vmul.f32 %v34, %v34
  %v81 = vmul.f32 %v35, %v35
  %v82 = vadd.f32 %v78, %v80
  %v83 = vadd.f32 %v79, %v81
  %v84 = vsub.f32 %v26, %v36
  %v85 = vsub.f32 %v27, %v37
  %v86 = vsub.f32 %v28, %v38
  %v87 = vsub.f32 %v29, %v39
  %v88 = vmul.f32 %v84, %v84
  %v89 = vmul.f32 %v85, %v85
  %v90 = vmul.f32 %v86, %v86
  %v91 = vmul.f32 %v87, %v87
  %v92 = vadd.f32 %v88, %v90
  %v93 = vadd.f32 %v89, %v91
  %v94 = vmul.f32 %v84, %v32
  %v95 = vmul.f32 %v85, %v33
  %v96 = vmul.f32 %v86, %v34
  %v97 = vmul.f32 %v87, %v35
  %v98 = vadd.f32 %v94, %v96
  %v99 = vadd.f32 %v95, %v97
  %v100 = vadd.f32 %v76, %v82
  %v101 = vadd.f32 %v77, %v83
  %v102 = vmul.f32 %v76, %v100
  %v103 = vmul.f32 %v77, %v101
  %v104 = vlog2.pop %v102
  %v105 = vmul.f32 %v104, 0.6931472
  %v106 = vlog2.pop %v103
  %v107 = vmul.f32 %v106, 0.6931472
  %v108 = vadd.f32 %v105, 1.837877
  %v109 = vadd.f32 %v107, 1.837877
  %v110 = vrcp.pop %v76
  %v111 = vmul.f32 %v92, %v110
  %v112 = vrcp.pop %v77
  %v113 = vmul.f32 %v93, %v112
  %v114 = vadd.f32 %v108, %v111
  %v115 = vadd.f32 %v109, %v113
  %v116 = vmul.f32 %v98, %v98
  %v117 = vmul.f32 %v99, %v99
  %v118 = vrcp.pop %v102
  %v119 = vmul.f32 %v116, %v118
  %v120 = vrcp.pop %v103
  %v121 = vmul.f32 %v117, %v120
  %v122 = vsub.f32 %v114, %v119
  %v123 = vsub.f32 %v115, %v121
  %v124 = vmul.f32 %v122, 0.5
  %v125 = vmul.f32 %v123, 0.5
  %v126 = vadd.f32 %v124, %v125
  %127 = vst [vmem:[%s7] sm:$0xff] %v126
  // Predicated region
  $region30: #{indep_anisotropic_gaussian_uv_loss.1} parent=0 // pred_check
    _
  $region31: #{indep_anisotropic_gaussian_uv_loss.1} parent=0 // pred_check_branch
    %129 = sbr.rel (0) target = $region33
  $region32: #{indep_anisotropic_gaussian_uv_loss.1} parent=0 // pred_region
    _
  $region33: #{indep_anisotropic_gaussian_uv_loss.1} parent=0 // pred_fallthru
    _
  // Predicated region
  $region34: #{indep_anisotropic_gaussian_uv_loss.1} parent=0 // pred_check
    _
  $region35: #{indep_anisotropic_gaussian_uv_loss.1} parent=0 // pred_check_branch
    %131 = sbr.rel (0) target = $region37
  $region36: #{indep_anisotropic_gaussian_uv_loss.1} parent=0 // pred_region
    _
  $region37: #{indep_anisotropic_gaussian_uv_loss.1} parent=0 // pred_fallthru
    _

</llo_original>
